<compile_context>
chip_gen: v7x
topology: tpu7x:2x2x1
jax: 0.10.0
libtpu: 0.0.40
codegen_flags: <defaults>
</compile_context>

<pallas_src>
import functools

import jax
import jax.numpy as jnp
from jax import lax
from jax.experimental import pallas as pl
from jax.experimental.pallas import tpu as pltpu


def _round_up(n, m):
    return ((n + m - 1) // m) * m


def _pick_tm(n_rows, n_cls, itemsize,
             tile_bytes=2 * 1024 * 1024, max_tm=1024):
    """Largest multiple-of-8 row tile whose logits block fits the budget."""
    rows_by_vmem = max(8, tile_bytes // max(1, n_cls * itemsize))
    tm = min(rows_by_vmem, max_tm, _round_up(n_rows, 8))
    return max(8, (tm // 8) * 8)


def _row_ce(logits_ref, tgt_ref, mask_ref, n_rows):
    """Per-row masked cross entropy for one (tm, C) tile.

    Returns (loss, eff_mask), both (tm, 1) f32, with rows past the true row
    count `n_rows` (ragged last tile) forced to exactly zero.
    """
    tm = logits_ref.shape[0]
    x = logits_ref[...].astype(jnp.float32)                  # (tm, C)
    m = jnp.max(x, axis=-1, keepdims=True)                   # (tm, 1)
    lse = jnp.log(jnp.sum(jnp.exp(x - m), axis=-1, keepdims=True)) + m

    tgt = tgt_ref[...]                                        # (tm, 1) int32
    col = lax.broadcasted_iota(jnp.int32, x.shape, 1)         # (tm, C)
    tgt_logit = jnp.sum(jnp.where(col == tgt, x, 0.0),
                        axis=-1, keepdims=True)               # (tm, 1)

    # Validity of each row of this tile (guards the ragged last block, whose
    # out-of-bounds region contains undefined data).
    row = pl.program_id(0) * tm + lax.broadcasted_iota(jnp.int32, (tm, 1), 0)
    valid = row < n_rows

    eff_mask = jnp.where(valid, mask_ref[...], 0.0)           # (tm, 1)
    loss = jnp.where(valid, lse - tgt_logit, 0.0) * eff_mask  # (tm, 1)
    return loss, eff_mask


def _ce_rows_kernel(logits_ref, tgt_ref, mask_ref, loss_ref, *, n_rows):
    """reduction='none': emit the per-row masked loss."""
    loss, _ = _row_ce(logits_ref, tgt_ref, mask_ref, n_rows)
    loss_ref[...] = loss


def _ce_sums_kernel(logits_ref, tgt_ref, mask_ref,
                    ploss_ref, pmask_ref, *, n_rows):
    """reduction='sum'/'mean': emit per-block partial sums (no per-row output)."""
    loss, eff_mask = _row_ce(logits_ref, tgt_ref, mask_ref, n_rows)
    ploss_ref[...] = jnp.sum(loss, keepdims=True).reshape(1, 1, 1)
    pmask_ref[...] = jnp.sum(eff_mask, keepdims=True).reshape(1, 1, 1)


def cross_entropy_loss(logits, targets, lens, reduction="mean", tm=None):
    """Pallas-backed equivalent of the PyTorch CrossEntropyLoss module."""
    B, T, C = logits.shape
    N = B * T

    x = logits.reshape(N, C)                       # keep native dtype
    tgt = targets.reshape(N, 1).astype(jnp.int32)
    # generate_length_mask(lens): mask[b, t] = (t < lens[b])
    mask = (jnp.arange(T, dtype=jnp.int32)[None, :] < lens[:, None])
    mask = mask.astype(jnp.float32).reshape(N, 1)

    itemsize = jnp.dtype(x.dtype).itemsize
    if tm is None:
        tm = _pick_tm(N, C, itemsize)
    grid = (pl.cdiv(N, tm),)
    g = grid[0]

    in_specs = [
        pl.BlockSpec((tm, C), lambda i: (i, 0)),   # logits tile
        pl.BlockSpec((tm, 1), lambda i: (i, 0)),   # targets (tiny vs logits)
        pl.BlockSpec((tm, 1), lambda i: (i, 0)),   # length mask
    ]
    compiler_params = pltpu.CompilerParams(
        dimension_semantics=("parallel",),         # no cross-step carries
        vmem_limit_bytes=32 * 1024 * 1024,
    )
    cost = pl.CostEstimate(
        flops=int(6 * N * C),
        transcendentals=int(N * C),
        bytes_accessed=int(N * C * itemsize + 12 * N),
    )

    if reduction == "none":
        loss_rows = pl.pallas_call(
            functools.partial(_ce_rows_kernel, n_rows=N),
            out_shape=jax.ShapeDtypeStruct((N, 1), jnp.float32),
            grid_spec=pltpu.PrefetchScalarGridSpec(
                num_scalar_prefetch=0,
                grid=grid,
                in_specs=in_specs,
                out_specs=pl.BlockSpec((tm, 1), lambda i: (i, 0)),
            ),
            compiler_params=compiler_params,
            cost_estimate=cost,
        )(x, tgt, mask)
        return loss_rows.reshape(B, T)

    if reduction not in ("sum", "mean"):
        raise ValueError(f"unknown reduction {reduction!r}")

    ploss, pmask = pl.pallas_call(
        functools.partial(_ce_sums_kernel, n_rows=N),
        out_shape=(
            jax.ShapeDtypeStruct((g, 1, 1), jnp.float32),
            jax.ShapeDtypeStruct((g, 1, 1), jnp.float32),
        ),
        grid_spec=pltpu.PrefetchScalarGridSpec(
            num_scalar_prefetch=0,
            grid=grid,
            in_specs=in_specs,
            out_specs=[
                pl.BlockSpec((1, 1, 1), lambda i: (i, 0, 0)),
                pl.BlockSpec((1, 1, 1), lambda i: (i, 0, 0)),
            ],
        ),
        compiler_params=compiler_params,
        cost_estimate=cost,
    )(x, tgt, mask)

    sum_loss = jnp.sum(ploss)
    if reduction == "sum":
        return sum_loss
    return sum_loss / jnp.sum(pmask)


def _reference(logits, targets, lens, reduction="mean"):
    """Pure-JAX reference for correctness checking."""
    B, T, C = logits.shape
    x = logits.reshape(-1, C).astype(jnp.float32)
    t = targets.reshape(-1)
    lse = jax.nn.logsumexp(x, axis=-1)
    tgt_logit = jnp.take_along_axis(x, t[:, None], axis=-1)[:, 0]
    loss = (lse - tgt_logit).reshape(B, T)
    mask = (jnp.arange(T)[None, :] < lens[:, None]).astype(jnp.float32)
    loss = loss * mask
    if reduction == "none":
        return loss
    if reduction == "sum":
        return loss.sum()
    return loss.sum() / mask.sum()


if __name__ == "__main__":
    B, T, C = 2, 8, 32
    key = jax.random.PRNGKey(0)
    k1, k2 = jax.random.split(key)
    logits = jax.random.normal(k1, (B, T, C), dtype=jnp.float32)
    targets = jax.random.randint(k2, (B, T), 0, C, dtype=jnp.int32)
    lens = jnp.array([8, 5], dtype=jnp.int32)

    out_mean = jax.block_until_ready(
        cross_entropy_loss(logits, targets, lens, reduction="mean"))
    out_sum = jax.block_until_ready(
        cross_entropy_loss(logits, targets, lens, reduction="sum"))
    out_none = jax.block_until_ready(
        cross_entropy_loss(logits, targets, lens, reduction="none"))

    ref_mean = _reference(logits, targets, lens, "mean")
    ref_sum = _reference(logits, targets, lens, "sum")
    ref_none = _reference(logits, targets, lens, "none")

    assert jnp.allclose(out_mean, ref_mean, atol=1e-5, rtol=1e-5)
    assert jnp.allclose(out_sum, ref_sum, atol=1e-5, rtol=1e-5)
    assert jnp.allclose(out_none, ref_none, atol=1e-5, rtol=1e-5)

    print("KERNEL_OK")
</pallas_src>

<mosaic_0001>
module attributes {stable_mosaic.version = 11 : i64} {
  func.func @_ce_sums_kernel(%arg0: i32, %arg1: memref<16x32xf32, #tpu.memory_space<vmem>>, %arg2: memref<16x1xi32, #tpu.memory_space<vmem>>, %arg3: memref<16x1xf32, #tpu.memory_space<vmem>>, %arg4: memref<1x1x1xf32, #tpu.memory_space<vmem>>, %arg5: memref<1x1x1xf32, #tpu.memory_space<vmem>>) attributes {dimension_semantics = [#tpu.dimension_semantics<parallel>], iteration_bounds = array<i64: 1>, scalar_prefetch = 0 : i64, scratch_operands = 0 : i64, tpu.core_type = #tpu.core_type<tc>, window_params = [{transform_indices = @transform_0, window_bounds = array<i64: 16, 32>}, {transform_indices = @transform_1, window_bounds = array<i64: 16, 1>}, {transform_indices = @transform_2, window_bounds = array<i64: 16, 1>}, {transform_indices = @transform_3, window_bounds = array<i64: 1, 1, 1>}, {transform_indices = @transform_4, window_bounds = array<i64: 1, 1, 1>}]} {
    %c0 = arith.constant 0 : index
    %c0_0 = arith.constant 0 : index
    %0 = vector.load %arg1[%c0, %c0_0] : memref<16x32xf32, #tpu.memory_space<vmem>>, vector<16x32xf32>
    %cst = arith.constant dense<0xFF800000> : vector<16xf32>
    %1 = vector.multi_reduction <maximumf>, %0, %cst [1] : vector<16x32xf32> to vector<16xf32>
    %2 = vector.shape_cast %1 : vector<16xf32> to vector<16x1xf32>
    %3 = vector.broadcast %2 : vector<16x1xf32> to vector<16x32xf32>
    %4 = arith.subf %0, %3 : vector<16x32xf32>
    %5 = math.exp %4 : vector<16x32xf32>
    %cst_1 = arith.constant dense<0.000000e+00> : vector<16xf32>
    %6 = vector.multi_reduction <add>, %5, %cst_1 [1] : vector<16x32xf32> to vector<16xf32>
    %7 = vector.shape_cast %6 : vector<16xf32> to vector<16x1xf32>
    %8 = math.log %7 : vector<16x1xf32>
    %9 = arith.addf %8, %2 : vector<16x1xf32>
    %c0_2 = arith.constant 0 : index
    %c0_3 = arith.constant 0 : index
    %10 = vector.load %arg2[%c0_2, %c0_3] : memref<16x1xi32, #tpu.memory_space<vmem>>, vector<16x1xi32>
    %11 = tpu.iota {dimensions = array<i32: 1>} : vector<16x32xi32>
    %12 = vector.broadcast %10 : vector<16x1xi32> to vector<16x32xi32>
    %13 = arith.cmpi eq, %11, %12 : vector<16x32xi32>
    %cst_4 = arith.constant 0.000000e+00 : f32
    %14 = vector.broadcast %cst_4 : f32 to vector<16x32xf32>
    %15 = arith.select %13, %0, %14 : vector<16x32xi1>, vector<16x32xf32>
    %cst_5 = arith.constant dense<0.000000e+00> : vector<16xf32>
    %16 = vector.multi_reduction <add>, %15, %cst_5 [1] : vector<16x32xf32> to vector<16xf32>
    %17 = vector.shape_cast %16 : vector<16xf32> to vector<16x1xf32>
    %c16_i32 = arith.constant 16 : i32
    %18 = arith.muli %arg0, %c16_i32 : i32
    %19 = tpu.iota {dimensions = array<i32: 0>} : vector<16x1xi32>
    %20 = vector.broadcast %18 : i32 to vector<16x1xi32>
    %21 = arith.addi %20, %19 : vector<16x1xi32>
    %c16_i32_6 = arith.constant 16 : i32
    %22 = vector.broadcast %c16_i32_6 : i32 to vector<16x1xi32>
    %23 = arith.cmpi slt, %21, %22 : vector<16x1xi32>
    %c0_7 = arith.constant 0 : index
    %c0_8 = arith.constant 0 : index
    %24 = vector.load %arg3[%c0_7, %c0_8] : memref<16x1xf32, #tpu.memory_space<vmem>>, vector<16x1xf32>
    %cst_9 = arith.constant 0.000000e+00 : f32
    %25 = vector.broadcast %cst_9 : f32 to vector<16x1xf32>
    %26 = arith.select %23, %24, %25 : vector<16x1xi1>, vector<16x1xf32>
    %27 = arith.subf %9, %17 : vector<16x1xf32>
    %cst_10 = arith.constant 0.000000e+00 : f32
    %28 = vector.broadcast %cst_10 : f32 to vector<16x1xf32>
    %29 = arith.select %23, %27, %28 : vector<16x1xi1>, vector<16x1xf32>
    %30 = arith.mulf %29, %26 : vector<16x1xf32>
    %31 = vector.shape_cast %30 : vector<16x1xf32> to vector<1x16x1xf32>
    %cst_11 = arith.constant dense<0.000000e+00> : vector<1xf32>
    %32 = vector.multi_reduction <add>, %31, %cst_11 [1, 2] : vector<1x16x1xf32> to vector<1xf32>
    %33 = vector.shape_cast %32 : vector<1xf32> to vector<1x1x1xf32>
    %34 = vector.extract %33[0, 0, 0] : f32 from vector<1x1x1xf32>
    %35 = vector.broadcast %34 : f32 to vector<1x1xf32>
    %36 = vector.shape_cast %35 : vector<1x1xf32> to vector<1x1x1xf32>
    %c0_12 = arith.constant 0 : index
    %c0_13 = arith.constant 0 : index
    %c0_14 = arith.constant 0 : index
    %37 = vector.load %arg4[%c0_12, %c0_13, %c0_14] : memref<1x1x1xf32, #tpu.memory_space<vmem>>, vector<1x1x1xf32>
    tpu.vector_store %arg4[%c0_12, %c0_13, %c0_14], %36 {strides = array<i32>} : memref<1x1x1xf32, #tpu.memory_space<vmem>>, vector<1x1x1xf32>,
    %38 = vector.shape_cast %26 : vector<16x1xf32> to vector<1x16x1xf32>
    %cst_15 = arith.constant dense<0.000000e+00> : vector<1xf32>
    %39 = vector.multi_reduction <add>, %38, %cst_15 [1, 2] : vector<1x16x1xf32> to vector<1xf32>
    %40 = vector.shape_cast %39 : vector<1xf32> to vector<1x1x1xf32>
    %41 = vector.extract %40[0, 0, 0] : f32 from vector<1x1x1xf32>
    %42 = vector.broadcast %41 : f32 to vector<1x1xf32>
    %43 = vector.shape_cast %42 : vector<1x1xf32> to vector<1x1x1xf32>
    %c0_16 = arith.constant 0 : index
    %c0_17 = arith.constant 0 : index
    %c0_18 = arith.constant 0 : index
    %44 = vector.load %arg5[%c0_16, %c0_17, %c0_18] : memref<1x1x1xf32, #tpu.memory_space<vmem>>, vector<1x1x1xf32>
    tpu.vector_store %arg5[%c0_16, %c0_17, %c0_18], %43 {strides = array<i32>} : memref<1x1x1xf32, #tpu.memory_space<vmem>>, vector<1x1x1xf32>,
    return
  }
  func.func @transform_0(%arg0: i32) -> (i32, i32) {
    %c0_i32 = arith.constant 0 : i32
    %c0_i32_0 = arith.constant 0 : i32
    return %arg0, %c0_i32 : i32, i32
  }
  func.func @transform_1(%arg0: i32) -> (i32, i32) {
    %c0_i32 = arith.constant 0 : i32
    %c0_i32_0 = arith.constant 0 : i32
    return %arg0, %c0_i32 : i32, i32
  }
  func.func @transform_2(%arg0: i32) -> (i32, i32) {
    %c0_i32 = arith.constant 0 : i32
    %c0_i32_0 = arith.constant 0 : i32
    return %arg0, %c0_i32 : i32, i32
  }
  func.func @transform_3(%arg0: i32) -> (i32, i32, i32) {
    %c0_i32 = arith.constant 0 : i32
    %c0_i32_0 = arith.constant 0 : i32
    %c0_i32_1 = arith.constant 0 : i32
    return %arg0, %c0_i32, %c0_i32_0 : i32, i32, i32
  }
  func.func @transform_4(%arg0: i32) -> (i32, i32, i32) {
    %c0_i32 = arith.constant 0 : i32
    %c0_i32_0 = arith.constant 0 : i32
    %c0_i32_1 = arith.constant 0 : i32
    return %arg0, %c0_i32, %c0_i32_0 : i32, i32, i32
  }
}

</mosaic_0001>

<llo_original>
// kernel: tpu_custom_call.1
$region0: #{tpu_custom_call.1}
  #allocation0 [shape = 'u32[]', space=smem, size = 0x4, offset = 0x4, fixed_abs, tag = 'smem constant byte address 0x4 - core index']
  #allocation1 [shape = 'u32[144,128]{1,0:T(1,128)}', space=vmem, size = 0x12000, scoped, tag = 'internal scratch']
  %s0 = inlined_call_operand.vmem [shape: f32[16,32], index: 0, kind: input, shape index: {}]
  %s1 = inlined_call_operand.vmem [shape: s32[16,1], index: 1, kind: input, shape index: {}]
  %s2 = inlined_call_operand.vmem [shape: f32[16,1], index: 2, kind: input, shape index: {}]
  %s3 = inlined_call_operand.hbm [shape: f32[1,1,1], index: 3, kind: output, shape index: {0}]
  %s4 = inlined_call_operand.hbm [shape: f32[1,1,1], index: 4, kind: output, shape index: {1}]
  %5 = xla_tuple %s3, %s4
  %s6 = sld [smem:[#allocation0]]
  $region30: #{tpu_custom_call.1} parent=0
    _
  %s8 = ssub.s32 1, %s6
  %s9 = scalar_select 0, %s8, %s6
  $region1: #{tpu_custom_call.1} parent=0
    #allocation2 [shape = 'u8[512]{0}', space=vmem, size = 0x400, scoped, tag = 'output window, operand 0, single buffered']
    #allocation3 [shape = 's32[1]{0}', space=sflag, size = 0x4, scoped, tag = 'scoped memory for tpu_custom_call.1']
    #allocation4 [shape = 'u8[512]{0}', space=vmem, size = 0x400, scoped, tag = 'output window, operand 1, single buffered']
    #allocation5 [shape = 's32[1]{0}', space=sflag, size = 0x4, scoped, tag = 'scoped memory for tpu_custom_call.1']
    %10 = vsyncpa [#allocation3], 0
    %11 = vsyncpa [#allocation5], 0
    // Predicated region
    $region2: #{tpu_custom_call.1} parent=1 // pred_check
      _
    $region3: #{tpu_custom_call.1} parent=1 // pred_check_branch
      %13 = sbr.rel (0) target = $region5
    $region4: #{tpu_custom_call.1} parent=1 // pred_region
      _
    $region5: #{tpu_custom_call.1} parent=1 // pred_fallthru
      _
    // Predicated region
    $region6: #{tpu_custom_call.1} parent=1 // pred_check
      _
    $region7: #{tpu_custom_call.1} parent=1 // pred_check_branch
      %15 = sbr.rel (0) target = $region9
    $region8: #{tpu_custom_call.1} parent=1 // pred_region
      _
    $region9: #{tpu_custom_call.1} parent=1 // pred_fallthru
      _
    // Predicated region
    $region10: #{tpu_custom_call.1} parent=1 // pred_check
      _
    $region11: #{tpu_custom_call.1} parent=1 // pred_check_branch
      %17 = sbr.rel (0) target = $region13
    $region12: #{tpu_custom_call.1} parent=1 // pred_region
      _
    $region13: #{tpu_custom_call.1} parent=1 // pred_fallthru
      _
    %v18 = vld [vmem:[%s0] sm:$0xff]
    %v19 = vld [vmem:[%s0 + $0x8] sm:$0xff]
    %vm20 = vcmask 261120
    %v21 = vsel %vm20, %v18, -inf
    %22 = vmax.xlane.f32.xlu0 %v21
    %v23 = vpop.xlane.xlu0 %22
    %v24 = vsel %vm20, %v19, -inf
    %25 = vmax.xlane.f32.xlu0 %v24
    %v26 = vpop.xlane.xlu0 %25
    %v27 = vsub.f32 %v18, %v23
    %v28 = vsub.f32 %v19, %v26
    %v29 = vmul.f32 %v27, 1.442695
    %v30 = vpow.pop %v29
    %v31 = vmul.f32 %v28, 1.442695
    %v32 = vpow.pop %v31
    %v33 = vsel %vm20, %v30, 0.0
    %34 = vadd.xlane.f32.xlu0 %v33
    %v35 = vpop.xlane.xlu0 %34
    %v36 = vsel %vm20, %v32, 0.0
    %37 = vadd.xlane.f32.xlu0 %v36
    %v38 = vpop.xlane.xlu0 %37
    %v39 = vlog2.pop %v35
    %v40 = vmul.f32 %v39, 0.6931472
    %v41 = vlog2.pop %v38
    %v42 = vmul.f32 %v41, 0.6931472
    %v43 = vadd.f32 %v40, %v23
    %v44 = vadd.f32 %v42, %v26
    %v45 = vld [vmem:[%s1] sm:$0xff]
    %v46 = vld [vmem:[%s1 + $0x8] sm:$0xff]
    %v47 = vlaneseq
    %v48 = vand.u32 %v47, 127
    %49 = vset.pattern.permute.xlu0 0
    %50 = vperm.xlu0 %49, %v45
    %v51 = vpop.permute.xlu0 %50
    %52 = vset.pattern.permute.xlu0 0
    %53 = vperm.xlu0 %52, %v46
    %v54 = vpop.permute.xlu0 %53
    %vm55 = vcmp.eq.s32.totalorder %v48, %v51
    %vm56 = vcmp.eq.s32.totalorder %v48, %v54
    %v57 = vsel %vm55, %v18, 0.0
    %v58 = vsel %vm56, %v19, 0.0
    %v59 = vsel %vm20, %v57, 0.0
    %60 = vadd.xlane.f32.xlu0 %v59
    %v61 = vpop.xlane.xlu0 %60
    %v62 = vsel %vm20, %v58, 0.0
    %63 = vadd.xlane.f32.xlu0 %v62
    %v64 = vpop.xlane.xlu0 %63
    %s65 = smul.u32 0, 16
    %v66 = vlaneseq
    %v67 = vshrl.u32 %v66, 7
    %v68 = vadd.s32 %v67, 8
    %v69 = vstv %s65
    %v70 = vadd.s32 %v69, %v67
    %v71 = vadd.s32 %v69, %v68
    %vm72 = vcmp.lt.s32.totalorder %v70, 16
    %vm73 = vcmp.lt.s32.totalorder %v71, 16
    %v74 = vld [vmem:[%s2] sm:$0xff]
    %v75 = vld [vmem:[%s2 + $0x8] sm:$0xff]
    %v76 = vsel %vm72, %v74, 0.0
    %v77 = vsel %vm73, %v75, 0.0
    %v78 = vsub.f32 %v43, %v61
    %v79 = vsub.f32 %v44, %v64
    %v80 = vsel %vm72, %v78, 0.0
    %v81 = vsel %vm73, %v79, 0.0
    %v82 = vmul.f32 %v80, %v76
    %v83 = vmul.f32 %v81, %v77
    %vm84 = vcmask 7168
    %v85 = vsel %vm84, %v82, 0.0
    %v86 = vsel %vm84, %v83, 0.0
    %v87 = vadd.f32 %v85, %v86
    %88 = vadd.xlane.f32.xlu0 %v87
    %v89 = vpop.xlane.xlu0 %88
    %v90 = vrot.slane %v89, 4
    %v91 = vadd.f32 %v89, %v90
    %v92 = vrot.slane %v91, 2
    %v93 = vadd.f32 %v91, %v92
    %v94 = vrot.slane %v93, 1
    %v95 = vadd.f32 %v93, %v94
    %s96 = vtos %v95
    %v97 = vstv %s96
    %vm98 = vcmask 0
    %99 = vst.msk [vmem:[#allocation2] sm:$0x1] %vm98, %v97
    %v100 = vsel %vm84, %v76, 0.0
    %v101 = vsel %vm84, %v77, 0.0
    %v102 = vadd.f32 %v100, %v101
    %103 = vadd.xlane.f32.xlu0 %v102
    %v104 = vpop.xlane.xlu0 %103
    %v105 = vrot.slane %v104, 4
    %v106 = vadd.f32 %v104, %v105
    %v107 = vrot.slane %v106, 2
    %v108 = vadd.f32 %v106, %v107
    %v109 = vrot.slane %v108, 1
    %v110 = vadd.f32 %v108, %v109
    %s111 = vtos %v110
    %v112 = vstv %s111
    %113 = vst.msk [vmem:[#allocation4] sm:$0x1] %vm98, %v112
    // Predicated region
    $region14: #{tpu_custom_call.1} parent=1 // pred_check
      _
    $region15: #{tpu_custom_call.1} parent=1 // pred_check_branch
      %115 = sbr.rel (0) target = $region17
    $region16: #{tpu_custom_call.1} parent=1 // pred_region
      %s117 = ssub.s32 16, 16
      %118 = vsyncadd [#allocation3], %s117
      %s120 = sshll.u32 [#allocation2], 4
      %s121 = int_to_ptr.vmem [resolvable:$true] %s120
      %123 = dma.vmem_to_hbm [thread:$0]  %s121, 16, %s3, [#allocation3]
    $region17: #{tpu_custom_call.1} parent=1 // pred_fallthru
      _
    // Predicated region
    $region18: #{tpu_custom_call.1} parent=1 // pred_check
      _
    $region19: #{tpu_custom_call.1} parent=1 // pred_check_branch
      %125 = sbr.rel (0) target = $region21
    $region20: #{tpu_custom_call.1} parent=1 // pred_region
      %s127 = ssub.s32 16, 16
      %128 = vsyncadd [#allocation5], %s127
      %s130 = sshll.u32 [#allocation4], 4
      %s131 = int_to_ptr.vmem [resolvable:$true] %s130
      %133 = dma.vmem_to_hbm [thread:$0]  %s131, 16, %s4, [#allocation5]
    $region21: #{tpu_custom_call.1} parent=1 // pred_fallthru
      _
    // Predicated region
    $region22: #{tpu_custom_call.1} parent=1 // pred_check
      _
    $region23: #{tpu_custom_call.1} parent=1 // pred_check_branch
      %135 = sbr.rel (0) target = $region25
    $region24: #{tpu_custom_call.1} parent=1 // pred_region
      %136 = dma.done [#allocation3], 16
    $region25: #{tpu_custom_call.1} parent=1 // pred_fallthru
      _
    // Predicated region
    $region26: #{tpu_custom_call.1} parent=1 // pred_check
      _
    $region27: #{tpu_custom_call.1} parent=1 // pred_check_branch
      %138 = sbr.rel (0) target = $region29
    $region28: #{tpu_custom_call.1} parent=1 // pred_region
      %139 = dma.done [#allocation5], 16
    $region29: #{tpu_custom_call.1} parent=1 // pred_fallthru
      _
    %140 = vsyncpa [#allocation3], 1
    %141 = vsyncpa [#allocation5], 1

</llo_original>
